<compile_context>
chip_gen: v5e
topology: v5e:2x2
jax: 0.10.0
libtpu: 0.0.40
codegen_flags: <defaults>
</compile_context>

<pallas_src>
import functools

import jax
import jax.numpy as jnp
from jax import lax
from jax.experimental import pallas as pl
from jax.experimental.pallas import tpu as pltpu

_LANES = 128


def _round_up(x: int, m: int) -> int:
    return ((x + m - 1) // m) * m


def _rmsle_partial_kernel(p_ref, a_ref, out_ref, *, tile_rows, n_valid_rows,
                          blocks_per_core):
    c = pl.program_id(0)  # "parallel" core-split axis
    i = pl.program_id(1)  # "arbitrary" reduction axis (accumulates into out_ref)

    @pl.when(i == 0)
    def _():
        out_ref[...] = jnp.zeros_like(out_ref)

    # Logical (unclamped) row position of this block; rows >= n_valid_rows are
    # either the padded overhang of the last block or fully clamped duplicate
    # blocks -> masked to zero (jnp.where also kills any NaN from garbage reads).
    base_row = (c * blocks_per_core + i) * tile_rows
    row_ids = lax.broadcasted_iota(jnp.int32, (tile_rows, _LANES), 0) + base_row
    valid = row_ids < n_valid_rows

    p = p_ref[...].astype(jnp.float32)
    a = a_ref[...].astype(jnp.float32)
    d = jnp.log1p(p) - jnp.log1p(a)
    sq = jnp.where(valid, d * d, 0.0)

    # (tile_rows, 128) -> (1, 8, 128): tile-aligned regroup + vreg adds (VPU only,
    # no per-step XLU reduce, no scalar read-modify-write).
    out_ref[...] += jnp.sum(sq.reshape(tile_rows // 8, 8, _LANES),
                            axis=0, keepdims=True)


def rmsle_loss(pred: jax.Array, actual: jax.Array, *,
               tile_rows: int = 2048, num_core_splits: int = 2) -> jax.Array:
    """Pallas RMSLE: sqrt(MSE(log1p(pred), log1p(actual))) over all elements."""
    assert pred.shape == actual.shape, "pred/actual shapes must match"

    n_total = pred.size
    flat_p = pred.reshape(-1)   # contiguous reshape: free
    flat_a = actual.reshape(-1)

    n_rows = n_total // _LANES           # lane-dense rows handled by the kernel
    tail = n_total - n_rows * _LANES     # < 128 trailing elements

    # ---- tiny ragged tail in plain JAX (avoids padding the whole array) ----
    if tail:
        tp = flat_p[n_rows * _LANES:].astype(jnp.float32)
        ta = flat_a[n_rows * _LANES:].astype(jnp.float32)
        tail_sum = jnp.sum((jnp.log1p(tp) - jnp.log1p(ta)) ** 2)
    else:
        tail_sum = jnp.float32(0.0)

    if n_rows == 0:  # degenerate: fewer than 128 elements total
        return jnp.sqrt(tail_sum / jnp.float32(n_total))

    # ---- bulk via the Pallas kernel ----------------------------------------
    if tail:
        # TODO(synk): this prefix slice copies the bulk once when size % 128 != 0;
        # fully copy-free ragged handling would need a 1-D/manual-DMA path.
        bulk_p = flat_p[: n_rows * _LANES]
        bulk_a = flat_a[: n_rows * _LANES]
    else:
        bulk_p, bulk_a = flat_p, flat_a
    p2 = bulk_p.reshape(n_rows, _LANES)
    a2 = bulk_a.reshape(n_rows, _LANES)

    # Block sizing: default 2048x128 f32 = 1 MiB per input block; keep a
    # multiple of 16 rows so bf16 inputs also tile legally; shrink for tiny
    # inputs. The last block may overhang n_rows -> masked in-kernel.
    tile_rows = max(16, (int(tile_rows) // 16) * 16)
    tile_rows = min(tile_rows, _round_up(n_rows, 16))

    nb = pl.cdiv(n_rows, tile_rows)            # row blocks over valid rows
    nc = max(1, int(num_core_splits))          # leading "parallel" axis (v7x: 2 TCs)
    blocks_per_core = pl.cdiv(nb, nc)

    def in_map(c, i):
        blk = c * blocks_per_core + i
        return (jnp.minimum(blk, nb - 1), 0)   # clamp padded slots; masked in-kernel

    kernel = functools.partial(
        _rmsle_partial_kernel,
        tile_rows=tile_rows,
        n_valid_rows=n_rows,
        blocks_per_core=blocks_per_core,
    )

    n_bulk = n_rows * _LANES
    cost = pl.CostEstimate(
        flops=5 * n_bulk,
        transcendentals=2 * n_bulk,
        bytes_accessed=n_bulk * (p2.dtype.itemsize + a2.dtype.itemsize)
        + nc * 8 * _LANES * 4,
    )

    partials = pl.pallas_call(
        kernel,
        out_shape=jax.ShapeDtypeStruct((nc, 8, _LANES), jnp.float32),
        grid_spec=pltpu.PrefetchScalarGridSpec(
            num_scalar_prefetch=0,
            grid=(nc, blocks_per_core),
            in_specs=[
                pl.BlockSpec((tile_rows, _LANES), in_map),
                pl.BlockSpec((tile_rows, _LANES), in_map),
            ],
            out_specs=pl.BlockSpec((1, 8, _LANES), lambda c, i: (c, 0, 0)),
        ),
        compiler_params=pltpu.CompilerParams(
            dimension_semantics=("parallel", "arbitrary"),
        ),
        cost_estimate=cost,
    )(p2, a2)

    bulk_sum = jnp.sum(partials)   # single tiny cross-lane reduce in the wrapper
    return jnp.sqrt((bulk_sum + tail_sum) / jnp.float32(n_total))


if __name__ == "__main__":
    key = jax.random.PRNGKey(0)
    k1, k2 = jax.random.split(key)
    # Small shapes: batch=2, channels=4, spatial=16x16 (NCHW-equivalent targets).
    shape = (2, 4, 16, 16)
    # RMSLE requires pred/actual > -1; use non-negative values as in typical usage.
    pred = jax.random.uniform(k1, shape, dtype=jnp.float32, minval=0.0, maxval=5.0)
    actual = jax.random.uniform(k2, shape, dtype=jnp.float32, minval=0.0, maxval=5.0)

    loss = rmsle_loss(pred, actual)
    jax.block_until_ready(loss)

    # Reference check in plain JAX (same semantics as the PyTorch module).
    ref = jnp.sqrt(jnp.mean((jnp.log(pred + 1.0) - jnp.log(actual + 1.0)) ** 2))
    assert jnp.allclose(loss, ref, rtol=1e-5, atol=1e-6), (loss, ref)

    print("KERNEL_OK")
</pallas_src>

<mosaic_0001>
module attributes {stable_mosaic.version = 11 : i64} {
  func.func @_rmsle_partial_kernel(%arg0: i32, %arg1: i32, %arg2: memref<16x128xf32, #tpu.memory_space<vmem>>, %arg3: memref<16x128xf32, #tpu.memory_space<vmem>>, %arg4: memref<1x8x128xf32, #tpu.memory_space<vmem>>) attributes {dimension_semantics = [#tpu.dimension_semantics<parallel>, #tpu.dimension_semantics<arbitrary>], iteration_bounds = array<i64: 2, 1>, scalar_prefetch = 0 : i64, scratch_operands = 0 : i64, tpu.core_type = #tpu.core_type<tc>, window_params = [{transform_indices = @transform_0, window_bounds = array<i64: 16, 128>}, {transform_indices = @transform_1, window_bounds = array<i64: 16, 128>}, {transform_indices = @transform_2, window_bounds = array<i64: 1, 8, 128>}]} {
    %c0_i32 = arith.constant 0 : i32
    %0 = arith.cmpi eq, %arg1, %c0_i32 : i32
    %1 = arith.extui %0 : i1 to i32
    %c0_i32_0 = arith.constant 0 : i32
    %2 = arith.cmpi ne, %1, %c0_i32_0 : i32
    scf.if %2 {
      %cst_12 = arith.constant 0.000000e+00 : f32
      %25 = vector.broadcast %cst_12 : f32 to vector<1x8x128xf32>
      %c0_13 = arith.constant 0 : index
      %c0_14 = arith.constant 0 : index
      %c0_15 = arith.constant 0 : index
      %26 = vector.load %arg4[%c0_13, %c0_14, %c0_15] : memref<1x8x128xf32, #tpu.memory_space<vmem>>, vector<1x8x128xf32>
      tpu.vector_store %arg4[%c0_13, %c0_14, %c0_15], %25 {strides = array<i32>} : memref<1x8x128xf32, #tpu.memory_space<vmem>>, vector<1x8x128xf32>,
    } else {
    }
    %c1_i32 = arith.constant 1 : i32
    %3 = arith.muli %arg0, %c1_i32 : i32
    %4 = arith.addi %3, %arg1 : i32
    %c16_i32 = arith.constant 16 : i32
    %5 = arith.muli %4, %c16_i32 : i32
    %6 = tpu.iota {dimensions = array<i32: 0>} : vector<16x128xi32>
    %7 = vector.broadcast %5 : i32 to vector<16x128xi32>
    %8 = arith.addi %6, %7 : vector<16x128xi32>
    %c16_i32_1 = arith.constant 16 : i32
    %9 = vector.broadcast %c16_i32_1 : i32 to vector<16x128xi32>
    %10 = arith.cmpi slt, %8, %9 : vector<16x128xi32>
    %c0 = arith.constant 0 : index
    %c0_2 = arith.constant 0 : index
    %11 = vector.load %arg2[%c0, %c0_2] : memref<16x128xf32, #tpu.memory_space<vmem>>, vector<16x128xf32>
    %c0_3 = arith.constant 0 : index
    %c0_4 = arith.constant 0 : index
    %12 = vector.load %arg3[%c0_3, %c0_4] : memref<16x128xf32, #tpu.memory_space<vmem>>, vector<16x128xf32>
    %13 = math.log1p %11 : vector<16x128xf32>
    %14 = math.log1p %12 : vector<16x128xf32>
    %15 = arith.subf %13, %14 : vector<16x128xf32>
    %16 = arith.mulf %15, %15 : vector<16x128xf32>
    %cst = arith.constant 0.000000e+00 : f32
    %17 = vector.broadcast %cst : f32 to vector<16x128xf32>
    %18 = arith.select %10, %16, %17 : vector<16x128xi1>, vector<16x128xf32>
    %c0_5 = arith.constant 0 : index
    %c0_6 = arith.constant 0 : index
    %c0_7 = arith.constant 0 : index
    %19 = vector.load %arg4[%c0_5, %c0_6, %c0_7] : memref<1x8x128xf32, #tpu.memory_space<vmem>>, vector<1x8x128xf32>
    %20 = vector.shape_cast %18 : vector<16x128xf32> to vector<2x8x128xf32>
    %cst_8 = arith.constant dense<0.000000e+00> : vector<8x128xf32>
    %21 = vector.multi_reduction <add>, %20, %cst_8 [0] : vector<2x8x128xf32> to vector<8x128xf32>
    %22 = vector.shape_cast %21 : vector<8x128xf32> to vector<1x8x128xf32>
    %23 = arith.addf %19, %22 : vector<1x8x128xf32>
    %c0_9 = arith.constant 0 : index
    %c0_10 = arith.constant 0 : index
    %c0_11 = arith.constant 0 : index
    %24 = vector.load %arg4[%c0_9, %c0_10, %c0_11] : memref<1x8x128xf32, #tpu.memory_space<vmem>>, vector<1x8x128xf32>
    tpu.vector_store %arg4[%c0_9, %c0_10, %c0_11], %23 {strides = array<i32>} : memref<1x8x128xf32, #tpu.memory_space<vmem>>, vector<1x8x128xf32>,
    return
  }
  func.func @transform_0(%arg0: i32, %arg1: i32) -> (i32, i32) {
    %c1_i32 = arith.constant 1 : i32
    %0 = arith.muli %arg0, %c1_i32 : i32
    %1 = arith.addi %0, %arg1 : i32
    %c0_i32 = arith.constant 0 : i32
    %2 = arith.minsi %1, %c0_i32 : i32
    %c0_i32_0 = arith.constant 0 : i32
    %c0_i32_1 = arith.constant 0 : i32
    return %2, %c0_i32_0 : i32, i32
  }
  func.func @transform_1(%arg0: i32, %arg1: i32) -> (i32, i32) {
    %c1_i32 = arith.constant 1 : i32
    %0 = arith.muli %arg0, %c1_i32 : i32
    %1 = arith.addi %0, %arg1 : i32
    %c0_i32 = arith.constant 0 : i32
    %2 = arith.minsi %1, %c0_i32 : i32
    %c0_i32_0 = arith.constant 0 : i32
    %c0_i32_1 = arith.constant 0 : i32
    return %2, %c0_i32_0 : i32, i32
  }
  func.func @transform_2(%arg0: i32, %arg1: i32) -> (i32, i32, i32) {
    %c0_i32 = arith.constant 0 : i32
    %c0_i32_0 = arith.constant 0 : i32
    %c0_i32_1 = arith.constant 0 : i32
    return %arg0, %c0_i32, %c0_i32_0 : i32, i32, i32
  }
}

</mosaic_0001>

<llo_original>
// kernel: tpu_custom_call.1
$region0: #{tpu_custom_call.1}
  #allocation0 [shape = 'u32[]', space=smem, size = 0x4, offset = 0x4, fixed_abs, tag = 'smem constant byte address 0x4 - core index']
  #allocation1 [shape = 'u32[72,128]{1,0:T(1,128)}', space=vmem, size = 0x9000, scoped, tag = 'internal scratch']
  %s0 = inlined_call_operand.hbm [shape: f32[16,128], index: 0, kind: input, shape index: {}]
  %s1 = inlined_call_operand.hbm [shape: f32[16,128], index: 1, kind: input, shape index: {}]
  %s2 = inlined_call_operand.hbm [shape: f32[2,8,128], index: 2, kind: output, shape index: {}]
  %s3 = sld [smem:[#allocation0]]
  $region53: #{tpu_custom_call.1} parent=0
    _
  %s5 = ssub.s32 1, %s3
  %s6 = scalar_select 0, %s5, %s3
  $region1: #{tpu_custom_call.1} parent=0
    #allocation2 [shape = 'u8[16384]{0}', space=vmem, size = 0x4000, scoped, tag = 'input window, operand 0']
    #allocation3 [shape = 's32[2]{0}', space=sflag, size = 0x8, scoped, tag = 'scoped memory for tpu_custom_call.1']
    #allocation4 [shape = 's32[2]{0}', space=sflag, size = 0x8, scoped, tag = 'scoped memory for tpu_custom_call.1']
    #allocation5 [shape = 'u8[16384]{0}', space=vmem, size = 0x4000, scoped, tag = 'input window, operand 1']
    #allocation6 [shape = 's32[2]{0}', space=sflag, size = 0x8, scoped, tag = 'scoped memory for tpu_custom_call.1']
    #allocation7 [shape = 'u8[8192]{0}', space=vmem, size = 0x2000, scoped, tag = 'output window, operand 0']
    %7 = vsyncpa [#allocation3], 0
    %s8 = scalar_lea.sflag [#allocation3], 1
    %9 = vsyncpa %s8, 0
    %10 = vsyncpa [#allocation6], 0
    %s11 = scalar_lea.sflag [#allocation6], 1
    %12 = vsyncpa %s11, 0
    %13 = vsyncpa [#allocation4], 0
    %s14 = scalar_lea.sflag [#allocation4], 1
    %15 = vsyncpa %s14, 0
    loop: start=0, step=1, limit=4
    $region2: #{tpu_custom_call.1} parent=1 // loop_pre_header
      _
    $region3: #{tpu_custom_call.1} parent=1 // loop_header
      %s17 = sphi 0, %s21
      %p18 = scmp.ge.s32.totalorder %s17, 4
      %s24 = sphi 0, %s36
      %s25 = sphi 0, %s32
      %s26 = sphi 0, %s24
      %s27 = sphi 0, %s25
      %s28 = sphi 0, %s26
      %s29 = sphi 0, %s27
      %s45 = sphi 0, %s47
      %s48 = sphi 0, %s45
      %s49 = sphi 0, %s48
      %s65 = sphi 0, %s49
      %s77 = sphi 0, %s79
      %s80 = sphi 0, %s77
      %s81 = sphi 0, %s80
      %s97 = sphi 0, %s81
      %s103 = sphi 0, %s105
      %s106 = sphi 0, %s103
      %s107 = sphi 0, %s106
      %s123 = sphi 0, %s107
    $region4: #{tpu_custom_call.1} parent=1 // loop_header_branch
      %20 = sbr.rel (%p18) target = $region8
    $region5: #{tpu_custom_call.1} parent=1 // loop_body
      %s22 = ssub.s32 %s17, 1
      %s23 = ssub.s32 %s17, 2
      %s30 = sadd.s32 1, %s25
      %p31 = scmp.ge.s32.totalorder %s30, 1
      %s32 = scalar_select %p31, 0, %s30
      %s33 = sadd.s32 1, %s24
      %s34 = scalar_select %p31, %s33, %s24
      %p35 = scmp.ge.s32.totalorder %s34, 2
      %s36 = scalar_select %p35, 0, %s34
      %s37 = sadd.s32 %s24, %s25
      %p38 = scmp.lt.s32.totalorder %s37, 0
      %s39 = scalar_select %p38, %s37, 0
      %s40 = sadd.s32 %s36, %s32
      %p41 = scmp.lt.s32.totalorder %s40, 0
      %s42 = scalar_select %p41, %s40, 0
      %s43 = ssub.s32 %s39, %s42
      %p44 = scmp.eq.s32.totalorder %s43, 0
      %s46 = sadd.s32 %s45, 1
      %s47 = scalar_select %p44, %s45, %s46
      %p50 = pneg %p44
      %p51 = scmp.eq.s32.totalorder %s17, 1
      %p52 = por %p50, %p51
      %p53 = scmp.ne.s32.totalorder %s45, %s48
      %p54 = scmp.eq.s32.totalorder %s17, 0
      %p55 = por %p53, %p54
      %p56 = scmp.ne.s32.totalorder %s45, %s48
      %p57 = scmp.eq.s32.totalorder %s22, 1
      %p58 = por %p56, %p57
      %p59 = scmp.ne.s32.totalorder %s48, %s49
      %p60 = scmp.eq.s32.totalorder %s22, 0
      %p61 = por %p59, %p60
      %p62 = scmp.ne.s32.totalorder %s48, %s49
      %p63 = scmp.eq.s32.totalorder %s23, 1
      %p64 = por %p62, %p63
      %p66 = scmp.ne.s32.totalorder %s49, %s65
      %p67 = scmp.eq.s32.totalorder %s23, 0
      %p68 = por %p66, %p67
      %s69 = sadd.s32 %s24, %s25
      %p70 = scmp.lt.s32.totalorder %s69, 0
      %s71 = scalar_select %p70, %s69, 0
      %s72 = sadd.s32 %s36, %s32
      %p73 = scmp.lt.s32.totalorder %s72, 0
      %s74 = scalar_select %p73, %s72, 0
      %s75 = ssub.s32 %s71, %s74
      %p76 = scmp.eq.s32.totalorder %s75, 0
      %s78 = sadd.s32 %s77, 1
      %s79 = scalar_select %p76, %s77, %s78
      %p82 = pneg %p76
      %p83 = scmp.eq.s32.totalorder %s17, 1
      %p84 = por %p82, %p83
      %p85 = scmp.ne.s32.totalorder %s77, %s80
      %p86 = scmp.eq.s32.totalorder %s17, 0
      %p87 = por %p85, %p86
      %p88 = scmp.ne.s32.totalorder %s77, %s80
      %p89 = scmp.eq.s32.totalorder %s22, 1
      %p90 = por %p88, %p89
      %p91 = scmp.ne.s32.totalorder %s80, %s81
      %p92 = scmp.eq.s32.totalorder %s22, 0
      %p93 = por %p91, %p92
      %p94 = scmp.ne.s32.totalorder %s80, %s81
      %p95 = scmp.eq.s32.totalorder %s23, 1
      %p96 = por %p94, %p95
      %p98 = scmp.ne.s32.totalorder %s81, %s97
      %p99 = scmp.eq.s32.totalorder %s23, 0
      %p100 = por %p98, %p99
      %s101 = ssub.s32 %s24, %s36
      %p102 = scmp.eq.s32.totalorder %s101, 0
      %s104 = sadd.s32 %s103, 1
      %s105 = scalar_select %p102, %s103, %s104
      %p108 = pneg %p102
      %p109 = scmp.eq.s32.totalorder %s17, 1
      %p110 = por %p108, %p109
      %p111 = scmp.ne.s32.totalorder %s103, %s106
      %p112 = scmp.eq.s32.totalorder %s17, 0
      %p113 = por %p111, %p112
      %p114 = scmp.ne.s32.totalorder %s103, %s106
      %p115 = scmp.eq.s32.totalorder %s22, 1
      %p116 = por %p114, %p115
      %p117 = scmp.ne.s32.totalorder %s106, %s107
      %p118 = scmp.eq.s32.totalorder %s22, 0
      %p119 = por %p117, %p118
      %p120 = scmp.ne.s32.totalorder %s106, %s107
      %p121 = scmp.eq.s32.totalorder %s23, 1
      %p122 = por %p120, %p121
      %p124 = scmp.ne.s32.totalorder %s107, %s123
      %p125 = scmp.eq.s32.totalorder %s23, 0
      %p126 = por %p124, %p125
      %p127 = scmp.le.s32.totalorder 1, %s17
      %p128 = scmp.lt.s32.totalorder %s17, 3
      %p129 = pnand %p127, %p128
      %p130 = pneg %p129
      // Predicated region
      $region9: #{tpu_custom_call.1} parent=5 // pred_check
        _
      $region10: #{tpu_custom_call.1} parent=5 // pred_check_branch
        %132 = sbr.rel (%p129) target = $region12
      $region11: #{tpu_custom_call.1} parent=5 // pred_region
        %s133 = ssub.s32 %s17, 1
      $region12: #{tpu_custom_call.1} parent=5 // pred_fallthru
        _
      %p134 = scmp.lt.s32.totalorder %s17, 2
      // Predicated region
      $region13: #{tpu_custom_call.1} parent=5 // pred_check
        %p135 = pneg %p134
      $region14: #{tpu_custom_call.1} parent=5 // pred_check_branch
        %137 = sbr.rel (%p135) target = $region16
      $region15: #{tpu_custom_call.1} parent=5 // pred_region
        // Predicated region
        $region17: #{tpu_custom_call.1} parent=15 // pred_check
          %p138 = pneg %p55
        $region18: #{tpu_custom_call.1} parent=15 // pred_check_branch
          %140 = sbr.rel (%p138) target = $region20
        $region19: #{tpu_custom_call.1} parent=15 // pred_region
          %s141 = sand.u32 %s45, 1
          %s142 = scalar_lea.sflag [#allocation3], %s141
          %s143 = sand.u32 %s45, 1
          %s144 = smul.addr %s143, 16
          %s145 = scalar_lea.vmem [#allocation2], %s144
          %s146 = sadd.s32 %s24, %s25
          %p147 = scmp.lt.s32.totalorder %s146, 0
          %s148 = scalar_select %p147, %s146, 0
          %s149 = smul.u32 2, %s148
          %151 = vsyncadd %s142, 0
          %s152 = smul.addr %s149, 8
          %s153 = scalar_lea.hbm %s0, %s152
          %s154 = sshll.u32 %s153, 4
          %s155 = int_to_ptr.hbm [resolvable:$true] %s154
          %s156 = sshll.u32 %s145, 4
          %s157 = int_to_ptr.vmem [resolvable:$true] %s156
          %162 = dma.hbm_to_vmem [thread:$0]  %s155, 256, %s157, %s142, 128, 128, 8
        $region20: #{tpu_custom_call.1} parent=15 // pred_fallthru
          _
        // Predicated region
        $region21: #{tpu_custom_call.1} parent=15 // pred_check
          %p163 = pneg %p87
        $region22: #{tpu_custom_call.1} parent=15 // pred_check_branch
          %165 = sbr.rel (%p163) target = $region24
        $region23: #{tpu_custom_call.1} parent=15 // pred_region
          %s166 = sand.u32 %s77, 1
          %s167 = scalar_lea.sflag [#allocation6], %s166
          %s168 = sand.u32 %s77, 1
          %s169 = smul.addr %s168, 16
          %s170 = scalar_lea.vmem [#allocation5], %s169
          %s171 = sadd.s32 %s24, %s25
          %p172 = scmp.lt.s32.totalorder %s171, 0
          %s173 = scalar_select %p172, %s171, 0
          %s174 = smul.u32 2, %s173
          %176 = vsyncadd %s167, 0
          %s177 = smul.addr %s174, 8
          %s178 = scalar_lea.hbm %s1, %s177
          %s179 = sshll.u32 %s178, 4
          %s180 = int_to_ptr.hbm [resolvable:$true] %s179
          %s181 = sshll.u32 %s170, 4
          %s182 = int_to_ptr.vmem [resolvable:$true] %s181
          %187 = dma.hbm_to_vmem [thread:$0]  %s180, 256, %s182, %s167, 128, 128, 8
        $region24: #{tpu_custom_call.1} parent=15 // pred_fallthru
          _
      $region16: #{tpu_custom_call.1} parent=5 // pred_fallthru
        _
      %p188 = scmp.le.s32.totalorder 1, %s17
      %p189 = scmp.lt.s32.totalorder %s17, 3
      %p190 = pnand %p188, %p189
      %p191 = pneg %p190
      // Predicated region
      $region25: #{tpu_custom_call.1} parent=5 // pred_check
        _
      $region26: #{tpu_custom_call.1} parent=5 // pred_check_branch
        %193 = sbr.rel (%p190) target = $region28
      $region27: #{tpu_custom_call.1} parent=5 // pred_region
        %s194 = ssub.s32 %s17, 1
        %s195 = sand.u32 %s48, 1
        %s196 = scalar_lea.sflag [#allocation3], %s195
        %s197 = sand.u32 %s48, 1
        %s198 = smul.addr %s197, 16
        %s199 = scalar_lea.vmem [#allocation2], %s198
        // Predicated region
        $region29: #{tpu_custom_call.1} parent=27 // pred_check
          %p200 = pneg %p61
        $region30: #{tpu_custom_call.1} parent=27 // pred_check_branch
          %202 = sbr.rel (%p200) target = $region32
        $region31: #{tpu_custom_call.1} parent=27 // pred_region
          %204 = dma.done %s196, 256
        $region32: #{tpu_custom_call.1} parent=27 // pred_fallthru
          _
        %s205 = sand.u32 %s80, 1
        %s206 = scalar_lea.sflag [#allocation6], %s205
        %s207 = sand.u32 %s80, 1
        %s208 = smul.addr %s207, 16
        %s209 = scalar_lea.vmem [#allocation5], %s208
        // Predicated region
        $region33: #{tpu_custom_call.1} parent=27 // pred_check
          %p210 = pneg %p93
        $region34: #{tpu_custom_call.1} parent=27 // pred_check_branch
          %212 = sbr.rel (%p210) target = $region36
        $region35: #{tpu_custom_call.1} parent=27 // pred_region
          %214 = dma.done %s206, 256
        $region36: #{tpu_custom_call.1} parent=27 // pred_fallthru
          _
        %s215 = sand.u32 %s48, 1
        %s216 = scalar_lea.sflag [#allocation3], %s215
        %s217 = sand.u32 %s48, 1
        %s218 = smul.addr %s217, 16
        %s219 = scalar_lea.vmem [#allocation2], %s218
        %p220 = pneg %p61
        %p221 = pneg %p58
        %s222 = sand.u32 %s80, 1
        %s223 = scalar_lea.sflag [#allocation6], %s222
        %s224 = sand.u32 %s80, 1
        %s225 = smul.addr %s224, 16
        %s226 = scalar_lea.vmem [#allocation5], %s225
        %p227 = pneg %p93
        %p228 = pneg %p90
        %p229 = pneg %p119
        %p230 = pneg %p116
        %s231 = sand.u32 %s106, 1
        %s232 = scalar_lea.sflag [#allocation4], %s231
        %s233 = sand.u32 %s106, 1
        %s234 = smul.addr %s233, 8
        %s235 = scalar_lea.vmem [#allocation7], %s234
        %s236 = sadd.s32 %s26, %s27
        %p237 = scmp.lt.s32.totalorder %s236, 0
        %s238 = scalar_select %p237, %s236, 0
        %s239 = smul.u32 2, %s238
        %s240 = sadd.s32 %s26, %s27
        %p241 = scmp.lt.s32.totalorder %s240, 0
        %s242 = scalar_select %p241, %s240, 0
        %s243 = smul.u32 2, %s242
        %p244 = scmp.eq.s32.totalorder %s27, 0
        // Predicated region
        $region37: #{tpu_custom_call.1} parent=27 // pred_check
          %p245 = pneg %p244
        $region38: #{tpu_custom_call.1} parent=27 // pred_check_branch
          %247 = sbr.rel (%p245) target = $region40
        $region39: #{tpu_custom_call.1} parent=27 // pred_region
          %248 = vst [vmem:[%s235] sm:$0xff] 0.0
        $region40: #{tpu_custom_call.1} parent=27 // pred_fallthru
          _
        %s249 = sadd.s32 %s26, %s27
        %s250 = smul.u32 %s249, 16
        %v251 = vlaneseq
        %v252 = vshrl.u32 %v251, 7
        %v253 = vadd.s32 %v252, 8
        %v254 = vstv %s250
        %v255 = vadd.s32 %v252, %v254
        %v256 = vadd.s32 %v253, %v254
        %vm257 = vcmp.lt.s32.totalorder %v255, 16
        %vm258 = vcmp.lt.s32.totalorder %v256, 16
        %v259 = vld [vmem:[%s199] sm:$0xff]
        %v260 = vld [vmem:[%s199 + $0x8] sm:$0xff]
        %v261 = vld [vmem:[%s209] sm:$0xff]
        %v262 = vld [vmem:[%s209 + $0x8] sm:$0xff]
        %v263 = vadd.f32 %v259, 1.0
        %v264 = vlog2.pop %v263
        %v265 = vmul.f32 %v264, 0.6931472
        %v266 = vmul.f32 -0.5, %v259
        %v267 = vadd.f32 %v266, 1.0
        %v268 = vmul.f32 %v267, %v259
        %v269 = vand.u32 2147483647, %v259
        %vm270 = vcmp.lt.f32.partialorder %v269, 0.0004427343
        %v271 = vsel %vm270, %v268, %v265
        %v272 = vadd.f32 %v260, 1.0
        %v273 = vlog2.pop %v272
        %v274 = vmul.f32 %v273, 0.6931472
        %v275 = vmul.f32 -0.5, %v260
        %v276 = vadd.f32 %v275, 1.0
        %v277 = vmul.f32 %v276, %v260
        %v278 = vand.u32 2147483647, %v260
        %vm279 = vcmp.lt.f32.partialorder %v278, 0.0004427343
        %v280 = vsel %vm279, %v277, %v274
        %v281 = vadd.f32 %v261, 1.0
        %v282 = vlog2.pop %v281
        %v283 = vmul.f32 %v282, 0.6931472
        %v284 = vmul.f32 -0.5, %v261
        %v285 = vadd.f32 %v284, 1.0
        %v286 = vmul.f32 %v285, %v261
        %v287 = vand.u32 2147483647, %v261
        %vm288 = vcmp.lt.f32.partialorder %v287, 0.0004427343
        %v289 = vsel %vm288, %v286, %v283
        %v290 = vadd.f32 %v262, 1.0
        %v291 = vlog2.pop %v290
        %v292 = vmul.f32 %v291, 0.6931472
        %v293 = vmul.f32 -0.5, %v262
        %v294 = vadd.f32 %v293, 1.0
        %v295 = vmul.f32 %v294, %v262
        %v296 = vand.u32 2147483647, %v262
        %vm297 = vcmp.lt.f32.partialorder %v296, 0.0004427343
        %v298 = vsel %vm297, %v295, %v292
        %v299 = vsub.f32 %v271, %v289
        %v300 = vsub.f32 %v280, %v298
        %v301 = vmul.f32 %v299, %v299
        %v302 = vmul.f32 %v300, %v300
        %v303 = vsel %vm257, %v301, 0.0
        %v304 = vsel %vm258, %v302, 0.0
        %v305 = vld [vmem:[%s235] sm:$0xff]
        %v306 = vadd.f32 %v303, %v304
        %v307 = vadd.f32 %v305, %v306
        %308 = vst [vmem:[%s235] sm:$0xff] %v307
        %s309 = sand.u32 %s106, 1
        %s310 = scalar_lea.sflag [#allocation4], %s309
        %s311 = sand.u32 %s106, 1
        %s312 = smul.addr %s311, 8
        %s313 = scalar_lea.vmem [#allocation7], %s312
        // Predicated region
        $region41: #{tpu_custom_call.1} parent=27 // pred_check
          %p314 = pneg %p116
        $region42: #{tpu_custom_call.1} parent=27 // pred_check_branch
          %316 = sbr.rel (%p314) target = $region44
        $region43: #{tpu_custom_call.1} parent=27 // pred_region
          %318 = vsyncadd %s310, 0
          %s319 = smul.addr %s26, 8
          %s320 = scalar_lea.hbm %s2, %s319
          %s322 = sshll.u32 %s313, 4
          %s323 = int_to_ptr.vmem [resolvable:$true] %s322
          %s324 = sshll.u32 %s320, 4
          %s325 = int_to_ptr.hbm [resolvable:$true] %s324
          %327 = dma.vmem_to_hbm [thread:$0]  %s323, 128, %s325, %s310
        $region44: #{tpu_custom_call.1} parent=27 // pred_fallthru
          _
      $region28: #{tpu_custom_call.1} parent=5 // pred_fallthru
        _
      %p328 = scmp.le.s32.totalorder 2, %s17
      // Predicated region
      $region45: #{tpu_custom_call.1} parent=5 // pred_check
        %p329 = pneg %p328
      $region46: #{tpu_custom_call.1} parent=5 // pred_check_branch
        %331 = sbr.rel (%p329) target = $region48
      $region47: #{tpu_custom_call.1} parent=5 // pred_region
        %s332 = ssub.s32 %s17, 2
        // Predicated region
        $region49: #{tpu_custom_call.1} parent=47 // pred_check
          %p333 = pneg %p122
        $region50: #{tpu_custom_call.1} parent=47 // pred_check_branch
          %335 = sbr.rel (%p333) target = $region52
        $region51: #{tpu_custom_call.1} parent=47 // pred_region
          %s336 = sand.u32 %s107, 1
          %s337 = scalar_lea.sflag [#allocation4], %s336
          %s338 = sand.u32 %s107, 1
          %s339 = smul.addr %s338, 8
          %s340 = scalar_lea.vmem [#allocation7], %s339
          %342 = dma.done %s337, 128
        $region52: #{tpu_custom_call.1} parent=47 // pred_fallthru
          _
      $region48: #{tpu_custom_call.1} parent=5 // pred_fallthru
        _
    $region6: #{tpu_custom_call.1} parent=1 // loop_footer
      %s21 = sadd.s32 1, %s17
    $region7: #{tpu_custom_call.1} parent=1 // loop_footer_branch
      %16 = sbr.rel target = $region3
    $region8: #{tpu_custom_call.1} parent=1 // loop_exit
      _
    %343 = vsyncpa [#allocation3], 1
    %s344 = scalar_lea.sflag [#allocation3], 1
    %345 = vsyncpa %s344, 1
    %346 = vsyncpa [#allocation6], 1
    %s347 = scalar_lea.sflag [#allocation6], 1
    %348 = vsyncpa %s347, 1
    %349 = vsyncpa [#allocation4], 1
    %s350 = scalar_lea.sflag [#allocation4], 1
    %351 = vsyncpa %s350, 1

</llo_original>
